<compile_context>
chip_gen: v7x
topology: tpu7x:2x2x1
jax: 0.10.0
libtpu: 0.0.40
codegen_flags: <defaults>
</compile_context>

<pallas_src>
import functools

import jax
import jax.numpy as jnp
from jax.experimental import pallas as pl
from jax.experimental.pallas import tpu as pltpu  # noqa: F401  (kept for compiler-params tuning at larger shapes)

_EPS = 1e-5
_LANE = 128


def _round_up(x, m):
    return (x + m - 1) // m * m


def _encoder_kernel(x_ref, w1t_ref, bn1_ref, w2t_ref, bn2_ref, o_ref):
    # ---- Linear 1 (bias dropped: it cancels exactly under training-mode BN) ----
    x = x_ref[...].astype(jnp.bfloat16)
    h1 = jnp.dot(x, w1t_ref[...], preferred_element_type=jnp.float32)

    # ---- BatchNorm1d(H1) folded to scale/shift + ReLU (all f32) ----
    m1 = jnp.mean(h1, axis=0, keepdims=True)
    v1 = jnp.maximum(jnp.mean(h1 * h1, axis=0, keepdims=True) - m1 * m1, 0.0)
    s1 = bn1_ref[0:1, :] * jax.lax.rsqrt(v1 + _EPS)     # gamma * rsqrt(var+eps)
    t1 = bn1_ref[1:2, :] - m1 * s1                       # beta  - mean * s
    h1 = jnp.maximum(h1 * s1 + t1, 0.0)

    # ---- Linear 2 (bias dropped) ----
    h2 = jnp.dot(h1.astype(jnp.bfloat16), w2t_ref[...],
                 preferred_element_type=jnp.float32)

    # ---- BatchNorm1d(H2) folded to scale/shift + ReLU ----
    m2 = jnp.mean(h2, axis=0, keepdims=True)
    v2 = jnp.maximum(jnp.mean(h2 * h2, axis=0, keepdims=True) - m2 * m2, 0.0)
    s2 = bn2_ref[0:1, :] * jax.lax.rsqrt(v2 + _EPS)
    t2 = bn2_ref[1:2, :] - m2 * s2
    # Lane-dense (B, H2_pad) store; real columns are sliced out in the wrapper.
    o_ref[...] = jnp.maximum(h2 * s2 + t2, 0.0).astype(o_ref.dtype)


def prepare_params(params):
    """One-time repacking (call once, outside the hot path).

    - Weights pre-transposed to (in, out), cast to bf16, hidden dims zero-padded
      up to a multiple of 128 lanes.
    - BN gamma/beta packed into one (2, Hpad) f32 array per layer (zero padding
      keeps padded columns at exactly 0 after BN: var=0 -> scale = 0*rsqrt(eps)=0).
    - Linear biases are intentionally dropped: they cancel in training-mode BN.
    """
    w1, w2 = params["w1"], params["w2"]
    h1, n = w1.shape
    h2 = w2.shape[0]
    h1p, h2p = _round_up(h1, _LANE), _round_up(h2, _LANE)

    w1t = jnp.zeros((n, h1p), jnp.bfloat16).at[:, :h1].set(w1.T.astype(jnp.bfloat16))
    w2t = jnp.zeros((h1p, h2p), jnp.bfloat16).at[:h1, :h2].set(w2.T.astype(jnp.bfloat16))
    bn1 = (jnp.zeros((2, h1p), jnp.float32)
           .at[0, :h1].set(params["g1"]).at[1, :h1].set(params["be1"]))
    bn2 = (jnp.zeros((2, h2p), jnp.float32)
           .at[0, :h2].set(params["g2"]).at[1, :h2].set(params["be2"]))
    return {"w1t": w1t, "bn1": bn1, "w2t": w2t, "bn2": bn2}


@functools.partial(jax.jit, static_argnames=("out_features",))
def encoder_forward(x, prepared, *, out_features):
    """x: (B, N) float32. prepared: output of prepare_params. Returns (B, out_features)."""
    B = x.shape[0]
    h2p = prepared["w2t"].shape[1]
    out = pl.pallas_call(
        _encoder_kernel,
        out_shape=jax.ShapeDtypeStruct((B, h2p), jnp.float32),
        # Whole (small) arrays live in VMEM; single invocation, no grid.
    )(x, prepared["w1t"], prepared["bn1"], prepared["w2t"], prepared["bn2"])
    return out[:, :out_features]


def init_params(key, num_features, seq_len):
    n = num_features * seq_len
    h1 = n // 2
    h2 = n // 8
    k1, k2, k3, k4 = jax.random.split(key, 4)
    # PyTorch-like uniform(-1/sqrt(fan_in), 1/sqrt(fan_in)) init.
    bound1 = 1.0 / jnp.sqrt(n)
    bound2 = 1.0 / jnp.sqrt(h1)
    return {
        "w1": jax.random.uniform(k1, (h1, n), jnp.float32, -bound1, bound1),
        "b1": jax.random.uniform(k2, (h1,), jnp.float32, -bound1, bound1),
        "g1": jnp.ones((h1,), jnp.float32),
        "be1": jnp.zeros((h1,), jnp.float32),
        "w2": jax.random.uniform(k3, (h2, h1), jnp.float32, -bound2, bound2),
        "b2": jax.random.uniform(k4, (h2,), jnp.float32, -bound2, bound2),
        "g2": jnp.ones((h2,), jnp.float32),
        "be2": jnp.zeros((h2,), jnp.float32),
    }


def encoder_reference(x, params, matmul_dtype=jnp.float32):
    """Pure-JAX reference mirroring the PyTorch forward (training-mode BN),
    including the linear biases and two-pass variance. matmul_dtype lets the
    reference emulate the kernel's bf16 MXU operand precision."""
    def mm(a, b):
        return jnp.dot(a.astype(matmul_dtype), b.astype(matmul_dtype),
                       preferred_element_type=jnp.float32)

    h1 = mm(x, params["w1"].T) + params["b1"]
    m1 = h1.mean(0, keepdims=True)
    v1 = ((h1 - m1) ** 2).mean(0, keepdims=True)
    h1 = jnp.maximum((h1 - m1) / jnp.sqrt(v1 + _EPS) * params["g1"] + params["be1"], 0.0)
    h2 = mm(h1, params["w2"].T) + params["b2"]
    m2 = h2.mean(0, keepdims=True)
    v2 = ((h2 - m2) ** 2).mean(0, keepdims=True)
    return jnp.maximum((h2 - m2) / jnp.sqrt(v2 + _EPS) * params["g2"] + params["be2"], 0.0)


if __name__ == "__main__":
    num_features, seq_len, batch = 4, 16, 8   # n = 64, hidden1 = 32, hidden2 = 8
    key = jax.random.PRNGKey(0)
    kx, kp = jax.random.split(key)

    n = num_features * seq_len
    x = jax.random.normal(kx, (batch, n), jnp.float32)
    params = init_params(kp, num_features, seq_len)
    prepared = prepare_params(params)

    out = encoder_forward(x, prepared, out_features=n // 8)
    out = jax.block_until_ready(out)
    assert out.shape == (batch, n // 8)

    # Primary check: reference with matching bf16 matmul-operand precision.
    # This isolates the kernel's algebra (bias cancellation, folded BN,
    # single-pass variance, lane padding, output slicing).
    ref_bf16 = encoder_reference(x, params, matmul_dtype=jnp.bfloat16)
    assert jnp.allclose(out, ref_bf16, atol=2e-2, rtol=2e-2), \
        "mismatch vs bf16-operand reference"

    # Sanity check vs the exact f32 PyTorch-style forward. Looser tolerance:
    # bf16 MXU operand rounding gets amplified by BatchNorm over batch=8.
    ref_f32 = encoder_reference(x, params)
    assert jnp.allclose(out, ref_f32, atol=0.15, rtol=0.05), \
        "mismatch vs f32 reference"

    print("KERNEL_OK")
</pallas_src>

<mosaic_0001>
module attributes {stable_mosaic.version = 11 : i64} {
  func.func @_encoder_kernel(%arg0: memref<8x64xf32, #tpu.memory_space<vmem>>, %arg1: memref<64x128xbf16, #tpu.memory_space<vmem>>, %arg2: memref<2x128xf32, #tpu.memory_space<vmem>>, %arg3: memref<128x128xbf16, #tpu.memory_space<vmem>>, %arg4: memref<2x128xf32, #tpu.memory_space<vmem>>, %arg5: memref<8x128xf32, #tpu.memory_space<vmem>>) attributes {dimension_semantics = [], scalar_prefetch = 0 : i64, scratch_operands = 0 : i64, tpu.core_type = #tpu.core_type<tc>} {
    %c0 = arith.constant 0 : index
    %c0_0 = arith.constant 0 : index
    %0 = vector.load %arg0[%c0, %c0_0] : memref<8x64xf32, #tpu.memory_space<vmem>>, vector<8x64xf32>
    %1 = arith.truncf %0 : vector<8x64xf32> to vector<8x64xbf16>
    %c0_1 = arith.constant 0 : index
    %c0_2 = arith.constant 0 : index
    %2 = vector.load %arg1[%c0_1, %c0_2] : memref<64x128xbf16, #tpu.memory_space<vmem>>, vector<64x128xbf16>
    %cst = arith.constant dense<0.000000e+00> : vector<8x128xf32>
    %3 = tpu.matmul %1, %2, %cst {dimension_numbers = #tpu.dot_dimension_numbers<[1], [0], [0], [1], [0, 0, 1, 1], [], []>} : vector<8x64xbf16>, vector<64x128xbf16>, vector<8x128xf32> -> vector<8x128xf32>
    %cst_3 = arith.constant dense<0.000000e+00> : vector<128xf32>
    %4 = vector.multi_reduction <add>, %3, %cst_3 [0] : vector<8x128xf32> to vector<128xf32>
    %5 = vector.shape_cast %4 : vector<128xf32> to vector<1x128xf32>
    %cst_4 = arith.constant 8.000000e+00 : f32
    %6 = vector.broadcast %cst_4 : f32 to vector<1x128xf32>
    %7 = arith.divf %5, %6 : vector<1x128xf32>
    %8 = arith.mulf %3, %3 : vector<8x128xf32>
    %cst_5 = arith.constant dense<0.000000e+00> : vector<128xf32>
    %9 = vector.multi_reduction <add>, %8, %cst_5 [0] : vector<8x128xf32> to vector<128xf32>
    %10 = vector.shape_cast %9 : vector<128xf32> to vector<1x128xf32>
    %cst_6 = arith.constant 8.000000e+00 : f32
    %11 = vector.broadcast %cst_6 : f32 to vector<1x128xf32>
    %12 = arith.divf %10, %11 : vector<1x128xf32>
    %13 = arith.mulf %7, %7 : vector<1x128xf32>
    %14 = arith.subf %12, %13 : vector<1x128xf32>
    %cst_7 = arith.constant 0.000000e+00 : f32
    %15 = vector.broadcast %cst_7 : f32 to vector<1x128xf32>
    %16 = arith.maximumf %14, %15 : vector<1x128xf32>
    %c0_8 = arith.constant 0 : index
    %c0_9 = arith.constant 0 : index
    %17 = vector.load %arg2[%c0_8, %c0_9] : memref<2x128xf32, #tpu.memory_space<vmem>>, vector<1x128xf32>
    %cst_10 = arith.constant 9.99999974E-6 : f32
    %18 = vector.broadcast %cst_10 : f32 to vector<1x128xf32>
    %19 = arith.addf %16, %18 : vector<1x128xf32>
    %20 = math.rsqrt %19 : vector<1x128xf32>
    %21 = arith.mulf %17, %20 : vector<1x128xf32>
    %c1 = arith.constant 1 : index
    %c0_11 = arith.constant 0 : index
    %22 = vector.load %arg2[%c1, %c0_11] : memref<2x128xf32, #tpu.memory_space<vmem>>, vector<1x128xf32>
    %23 = arith.mulf %7, %21 : vector<1x128xf32>
    %24 = arith.subf %22, %23 : vector<1x128xf32>
    %25 = vector.broadcast %21 : vector<1x128xf32> to vector<8x128xf32>
    %26 = arith.mulf %3, %25 : vector<8x128xf32>
    %27 = vector.broadcast %24 : vector<1x128xf32> to vector<8x128xf32>
    %28 = arith.addf %26, %27 : vector<8x128xf32>
    %cst_12 = arith.constant 0.000000e+00 : f32
    %29 = vector.broadcast %cst_12 : f32 to vector<8x128xf32>
    %30 = arith.maximumf %28, %29 : vector<8x128xf32>
    %31 = arith.truncf %30 : vector<8x128xf32> to vector<8x128xbf16>
    %c0_13 = arith.constant 0 : index
    %c0_14 = arith.constant 0 : index
    %32 = vector.load %arg3[%c0_13, %c0_14] : memref<128x128xbf16, #tpu.memory_space<vmem>>, vector<128x128xbf16>
    %cst_15 = arith.constant dense<0.000000e+00> : vector<8x128xf32>
    %33 = tpu.matmul %31, %32, %cst_15 {dimension_numbers = #tpu.dot_dimension_numbers<[1], [0], [0], [1], [0, 0, 1, 1], [], []>} : vector<8x128xbf16>, vector<128x128xbf16>, vector<8x128xf32> -> vector<8x128xf32>
    %cst_16 = arith.constant dense<0.000000e+00> : vector<128xf32>
    %34 = vector.multi_reduction <add>, %33, %cst_16 [0] : vector<8x128xf32> to vector<128xf32>
    %35 = vector.shape_cast %34 : vector<128xf32> to vector<1x128xf32>
    %cst_17 = arith.constant 8.000000e+00 : f32
    %36 = vector.broadcast %cst_17 : f32 to vector<1x128xf32>
    %37 = arith.divf %35, %36 : vector<1x128xf32>
    %38 = arith.mulf %33, %33 : vector<8x128xf32>
    %cst_18 = arith.constant dense<0.000000e+00> : vector<128xf32>
    %39 = vector.multi_reduction <add>, %38, %cst_18 [0] : vector<8x128xf32> to vector<128xf32>
    %40 = vector.shape_cast %39 : vector<128xf32> to vector<1x128xf32>
    %cst_19 = arith.constant 8.000000e+00 : f32
    %41 = vector.broadcast %cst_19 : f32 to vector<1x128xf32>
    %42 = arith.divf %40, %41 : vector<1x128xf32>
    %43 = arith.mulf %37, %37 : vector<1x128xf32>
    %44 = arith.subf %42, %43 : vector<1x128xf32>
    %cst_20 = arith.constant 0.000000e+00 : f32
    %45 = vector.broadcast %cst_20 : f32 to vector<1x128xf32>
    %46 = arith.maximumf %44, %45 : vector<1x128xf32>
    %c0_21 = arith.constant 0 : index
    %c0_22 = arith.constant 0 : index
    %47 = vector.load %arg4[%c0_21, %c0_22] : memref<2x128xf32, #tpu.memory_space<vmem>>, vector<1x128xf32>
    %cst_23 = arith.constant 9.99999974E-6 : f32
    %48 = vector.broadcast %cst_23 : f32 to vector<1x128xf32>
    %49 = arith.addf %46, %48 : vector<1x128xf32>
    %50 = math.rsqrt %49 : vector<1x128xf32>
    %51 = arith.mulf %47, %50 : vector<1x128xf32>
    %c1_24 = arith.constant 1 : index
    %c0_25 = arith.constant 0 : index
    %52 = vector.load %arg4[%c1_24, %c0_25] : memref<2x128xf32, #tpu.memory_space<vmem>>, vector<1x128xf32>
    %53 = arith.mulf %37, %51 : vector<1x128xf32>
    %54 = arith.subf %52, %53 : vector<1x128xf32>
    %55 = vector.broadcast %51 : vector<1x128xf32> to vector<8x128xf32>
    %56 = arith.mulf %33, %55 : vector<8x128xf32>
    %57 = vector.broadcast %54 : vector<1x128xf32> to vector<8x128xf32>
    %58 = arith.addf %56, %57 : vector<8x128xf32>
    %cst_26 = arith.constant 0.000000e+00 : f32
    %59 = vector.broadcast %cst_26 : f32 to vector<8x128xf32>
    %60 = arith.maximumf %58, %59 : vector<8x128xf32>
    %c0_27 = arith.constant 0 : index
    %c0_28 = arith.constant 0 : index
    %61 = vector.load %arg5[%c0_27, %c0_28] : memref<8x128xf32, #tpu.memory_space<vmem>>, vector<8x128xf32>
    tpu.vector_store %arg5[%c0_27, %c0_28], %60 {strides = array<i32>} : memref<8x128xf32, #tpu.memory_space<vmem>>, vector<8x128xf32>,
    return
  }
}

</mosaic_0001>

<llo_original>
// kernel: encoder_forward.1
$region0: #{encoder_forward.1}
  #allocation0 [shape = 'u32[]', space=smem, size = 0x4, offset = 0x4, fixed_abs, tag = 'smem constant byte address 0x4 - core index']
  #allocation1 [shape = 'u32[144,128]{1,0:T(1,128)}', space=vmem, size = 0x12000, scoped, tag = 'internal scratch']
  %s0 = inlined_call_operand.hbm [shape: f32[8,64], index: 0, kind: input, shape index: {}]
  %s1 = inlined_call_operand.hbm [shape: bf16[64,128], index: 1, kind: input, shape index: {}]
  %s2 = inlined_call_operand.vmem [shape: f32[2,128], index: 2, kind: input, shape index: {}]
  %s3 = inlined_call_operand.hbm [shape: bf16[128,128], index: 3, kind: input, shape index: {}]
  %s4 = inlined_call_operand.vmem [shape: f32[2,128], index: 4, kind: input, shape index: {}]
  %s5 = inlined_call_operand.hbm [shape: f32[8,128], index: 5, kind: output, shape index: {}]
  %s6 = sld [smem:[#allocation0]]
  $region42: #{encoder_forward.1} parent=0
    _
  %s8 = ssub.s32 1, %s6
  %s9 = scalar_select 0, %s8, %s6
  $region1: #{encoder_forward.1} parent=0
    #allocation2 [shape = 'u8[4096]{0}', space=vmem, size = 0x1000, scoped, tag = 'input window, operand 0, single buffered']
    #allocation3 [shape = 's32[1]{0}', space=sflag, size = 0x4, scoped, tag = 'scoped memory for encoder_forward.1']
    #allocation4 [shape = 's32[1]{0}', space=sflag, size = 0x4, scoped, tag = 'scoped memory for encoder_forward.1']
    #allocation5 [shape = 'u8[16384]{0}', space=vmem, size = 0x4000, scoped, tag = 'input window, operand 1, single buffered']
    #allocation6 [shape = 's32[1]{0}', space=sflag, size = 0x4, scoped, tag = 'scoped memory for encoder_forward.1']
    #allocation7 [shape = 'u8[32768]{0}', space=vmem, size = 0x8000, scoped, tag = 'input window, operand 3, single buffered']
    #allocation8 [shape = 'u8[4096]{0}', space=vmem, size = 0x1000, scoped, tag = 'output window, operand 0, single buffered']
    %10 = vsyncpa [#allocation3], 0
    %11 = vsyncpa [#allocation6], 0
    %12 = vsyncpa [#allocation4], 0
    // Predicated region
    $region2: #{encoder_forward.1} parent=1 // pred_check
      _
    $region3: #{encoder_forward.1} parent=1 // pred_check_branch
      %14 = sbr.rel (0) target = $region5
    $region4: #{encoder_forward.1} parent=1 // pred_region
      %s16 = ssub.s32 128, 128
      %17 = vsyncadd [#allocation3], %s16
      %s19 = sshll.u32 [#allocation2], 4
      %s20 = int_to_ptr.vmem [resolvable:$true] %s19
      %22 = dma.hbm_to_vmem [thread:$0]  %s0, 128, %s20, [#allocation3]
    $region5: #{encoder_forward.1} parent=1 // pred_fallthru
      _
    // Predicated region
    $region6: #{encoder_forward.1} parent=1 // pred_check
      _
    $region7: #{encoder_forward.1} parent=1 // pred_check_branch
      %24 = sbr.rel (0) target = $region9
    $region8: #{encoder_forward.1} parent=1 // pred_region
      %s26 = ssub.s32 512, 512
      %27 = vsyncadd [#allocation6], %s26
      %s28 = sshll.u32 [#allocation5], 4
      %s29 = int_to_ptr.vmem [resolvable:$true] %s28
      %34 = dma.hbm_to_vmem [thread:$0]  %s1, 512, %s29, [#allocation6], 64, 64, 4
    $region9: #{encoder_forward.1} parent=1 // pred_fallthru
      _
    // Predicated region
    $region10: #{encoder_forward.1} parent=1 // pred_check
      _
    $region11: #{encoder_forward.1} parent=1 // pred_check_branch
      %36 = sbr.rel (0) target = $region13
    $region12: #{encoder_forward.1} parent=1 // pred_region
      _
    $region13: #{encoder_forward.1} parent=1 // pred_fallthru
      _
    // Predicated region
    $region14: #{encoder_forward.1} parent=1 // pred_check
      _
    $region15: #{encoder_forward.1} parent=1 // pred_check_branch
      %38 = sbr.rel (0) target = $region17
    $region16: #{encoder_forward.1} parent=1 // pred_region
      %s40 = ssub.s32 1024, 1024
      %41 = vsyncadd [#allocation6], %s40
      %s42 = sshll.u32 [#allocation7], 4
      %s43 = int_to_ptr.vmem [resolvable:$true] %s42
      %48 = dma.hbm_to_vmem [thread:$0]  %s3, 1024, %s43, [#allocation6], 64, 64, 4
    $region17: #{encoder_forward.1} parent=1 // pred_fallthru
      _
    // Predicated region
    $region18: #{encoder_forward.1} parent=1 // pred_check
      _
    $region19: #{encoder_forward.1} parent=1 // pred_check_branch
      %50 = sbr.rel (0) target = $region21
    $region20: #{encoder_forward.1} parent=1 // pred_region
      _
    $region21: #{encoder_forward.1} parent=1 // pred_fallthru
      _
    // Predicated region
    $region22: #{encoder_forward.1} parent=1 // pred_check
      _
    $region23: #{encoder_forward.1} parent=1 // pred_check_branch
      %52 = sbr.rel (0) target = $region25
    $region24: #{encoder_forward.1} parent=1 // pred_region
      %53 = dma.done [#allocation3], 128
    $region25: #{encoder_forward.1} parent=1 // pred_fallthru
      _
    // Predicated region
    $region26: #{encoder_forward.1} parent=1 // pred_check
      _
    $region27: #{encoder_forward.1} parent=1 // pred_check_branch
      %55 = sbr.rel (0) target = $region29
    $region28: #{encoder_forward.1} parent=1 // pred_region
      %56 = dma.done [#allocation6], 512
    $region29: #{encoder_forward.1} parent=1 // pred_fallthru
      _
    // Predicated region
    $region30: #{encoder_forward.1} parent=1 // pred_check
      _
    $region31: #{encoder_forward.1} parent=1 // pred_check_branch
      %58 = sbr.rel (0) target = $region33
    $region32: #{encoder_forward.1} parent=1 // pred_region
      %59 = dma.done [#allocation6], 1024
    $region33: #{encoder_forward.1} parent=1 // pred_fallthru
      _
    %v61 = vld [vmem:[#allocation2] sm:$0xff]
    %v62 = vpack.c.bf16 %v61, %v61
    %v63 = vld [vmem:[#allocation5] sm:$0xf]
    %v64 = vld [vmem:[#allocation5 + $0x4] sm:$0xf]
    %v65 = vld [vmem:[#allocation5 + $0x8] sm:$0xf]
    %v66 = vld [vmem:[#allocation5 + $0xc] sm:$0xf]
    %v67 = vld [vmem:[#allocation5 + $0x10] sm:$0xf]
    %v68 = vld [vmem:[#allocation5 + $0x14] sm:$0xf]
    %v69 = vld [vmem:[#allocation5 + $0x18] sm:$0xf]
    %v70 = vld [vmem:[#allocation5 + $0x1c] sm:$0xf]
    %v79 = vunpack.c.l.b16 %v63
    %v80 = vunpack.c.l.b16 %v64
    %v81 = vunpack.c.l.b16 %v65
    %v82 = vunpack.c.l.b16 %v66
    %v83 = vunpack.c.l.b16 %v67
    %v84 = vunpack.c.l.b16 %v68
    %v85 = vunpack.c.l.b16 %v69
    %v86 = vunpack.c.l.b16 %v70
    %v87 = vpack.c.b16 %v80, %v79
    %v88 = vpack.c.b16 %v82, %v81
    %v89 = vpack.c.b16 %v84, %v83
    %v90 = vpack.c.b16 %v86, %v85
    %vm95 = vcmask 523264
    %v97 = vsel %vm95, %v62, 0
    %99 = vmatprep.subr.bf16.mxu0 0
    %100 = vmatpush1.bf16.msra.mxu0 %v87
    %101 = vmatprep.subr.bf16.mxu0 0
    %102 = vmatpush1.bf16.msra.mxu0 %v88
    %103 = vmatprep.subr.bf16.mxu0 0
    %104 = vmatpush1.bf16.msra.mxu0 %v89
    %105 = vmatprep.subr.bf16.mxu0 0
    %106 = vmatpush1.bf16.msra.mxu0 %v90
    %107 = vmatprep.subr.bf16.mxu0 0
    %108 = vmatpush1.bf16.msra.mxu0 0
    %109 = vmatprep.subr.bf16.mxu0 0
    %110 = vmatpush1.bf16.msra.mxu0 0
    %111 = vmatprep.subr.bf16.mxu0 0
    %112 = vmatpush1.bf16.msra.mxu0 0
    %113 = vmatprep.subr.bf16.mxu0 0
    %114 = vmatpush1.bf16.msra.mxu0 0
    %115 = vmatprep.subr.bf16.mxu0 0
    %116 = vmatpush1.bf16.msra.mxu0 0
    %117 = vmatprep.subr.bf16.mxu0 0
    %118 = vmatpush1.bf16.msra.mxu0 0
    %119 = vmatprep.subr.bf16.mxu0 0
    %120 = vmatpush1.bf16.msra.mxu0 0
    %121 = vmatprep.subr.bf16.mxu0 0
    %122 = vmatpush1.bf16.msra.mxu0 0
    %123 = vmatprep.subr.bf16.mxu0 0
    %124 = vmatpush1.bf16.msra.mxu0 0
    %125 = vmatprep.subr.bf16.mxu0 0
    %126 = vmatpush1.bf16.msra.mxu0 0
    %127 = vmatprep.subr.bf16.mxu0 0
    %128 = vmatpush1.bf16.msra.mxu0 0
    %129 = vmatprep.subr.bf16.mxu0 0
    %130 = vmatpush1.bf16.msra.mxu0 0
    %131 = vmatprep.mubr.bf16.mxu0 0
    %132 = vmatmul.mubr.bf16.gmra.mrb[0].mxu0 %v97
    %v133 = vpop.f32.mrb[0].mxu0
    %v134 = vadd.f32 0.0, %v133
    %v135 = vpop.f32.mrb[0].mxu0
    %v136 = vpop.f32.mrb[0].mxu0
    %v137 = vpop.f32.mrb[0].mxu0
    %138 = vdwg.mxu0
    %v139 = vrot.slane %v134, 4
    %v140 = vadd.f32 %v134, %v139
    %v141 = vrot.slane %v140, 2
    %v142 = vadd.f32 %v140, %v141
    %v143 = vrot.slane %v142, 1
    %v144 = vadd.f32 %v142, %v143
    %v145 = vrcp.pop 8.0
    %v146 = vmul.f32 %v144, %v145
    %v147 = vmul.f32 %v134, %v134
    %v148 = vrot.slane %v147, 4
    %v149 = vadd.f32 %v147, %v148
    %v150 = vrot.slane %v149, 2
    %v151 = vadd.f32 %v149, %v150
    %v152 = vrot.slane %v151, 1
    %v153 = vadd.f32 %v151, %v152
    %v154 = vmul.f32 %v153, %v145
    %v155 = vmul.f32 %v146, %v146
    %v156 = vsub.f32 %v154, %v155
    %v157 = vmax.f32 %v156, 0.0
    %v158 = vld [vmem:[%s2] sm:$0x1]
    %v159 = vadd.f32 %v157, 1e-05
    %v160 = vrsqrt.pop %v159
    %v161 = vmul.f32 %v158, %v160
    %v162 = vld [vmem:[%s2 + $0x1] sm:$0x1]
    %v163 = vmul.f32 %v146, %v161
    %v164 = vsub.f32 %v162, %v163
    %v165 = vlaneseq
    %v166 = vshrl.u32 %v165, 7
    %v167 = vsub.s32 0, %v166
    %v168 = vrot.slane %v161, %v167
    %v169 = vmul.f32 %v134, %v168
    %v170 = vlaneseq
    %v171 = vshrl.u32 %v170, 7
    %v172 = vsub.s32 0, %v171
    %v173 = vrot.slane %v164, %v172
    %v174 = vadd.f32 %v169, %v173
    %v175 = vmax.f32 %v174, 0.0
    %v176 = vpack.c.bf16 %v175, %v175
    %v177 = vld [vmem:[#allocation7] sm:$0xf]
    %v178 = vld [vmem:[#allocation7 + $0x4] sm:$0xf]
    %v179 = vld [vmem:[#allocation7 + $0x8] sm:$0xf]
    %v180 = vld [vmem:[#allocation7 + $0xc] sm:$0xf]
    %v181 = vld [vmem:[#allocation7 + $0x10] sm:$0xf]
    %v182 = vld [vmem:[#allocation7 + $0x14] sm:$0xf]
    %v183 = vld [vmem:[#allocation7 + $0x18] sm:$0xf]
    %v184 = vld [vmem:[#allocation7 + $0x1c] sm:$0xf]
    %v185 = vld [vmem:[#allocation7 + $0x20] sm:$0xf]
    %v186 = vld [vmem:[#allocation7 + $0x24] sm:$0xf]
    %v187 = vld [vmem:[#allocation7 + $0x28] sm:$0xf]
    %v188 = vld [vmem:[#allocation7 + $0x2c] sm:$0xf]
    %v189 = vld [vmem:[#allocation7 + $0x30] sm:$0xf]
    %v190 = vld [vmem:[#allocation7 + $0x34] sm:$0xf]
    %v191 = vld [vmem:[#allocation7 + $0x38] sm:$0xf]
    %v192 = vld [vmem:[#allocation7 + $0x3c] sm:$0xf]
    %v209 = vunpack.c.l.b16 %v177
    %v210 = vunpack.c.l.b16 %v178
    %v211 = vunpack.c.l.b16 %v179
    %v212 = vunpack.c.l.b16 %v180
    %v213 = vunpack.c.l.b16 %v181
    %v214 = vunpack.c.l.b16 %v182
    %v215 = vunpack.c.l.b16 %v183
    %v216 = vunpack.c.l.b16 %v184
    %v217 = vunpack.c.l.b16 %v185
    %v218 = vunpack.c.l.b16 %v186
    %v219 = vunpack.c.l.b16 %v187
    %v220 = vunpack.c.l.b16 %v188
    %v221 = vunpack.c.l.b16 %v189
    %v222 = vunpack.c.l.b16 %v190
    %v223 = vunpack.c.l.b16 %v191
    %v224 = vunpack.c.l.b16 %v192
    %v225 = vpack.c.b16 %v210, %v209
    %v226 = vpack.c.b16 %v212, %v211
    %v227 = vpack.c.b16 %v214, %v213
    %v228 = vpack.c.b16 %v216, %v215
    %v229 = vpack.c.b16 %v218, %v217
    %v230 = vpack.c.b16 %v220, %v219
    %v231 = vpack.c.b16 %v222, %v221
    %v232 = vpack.c.b16 %v224, %v223
    %241 = vmatprep.subr.bf16.mxu0 0
    %242 = vmatpush1.bf16.msra.mxu0 %v225
    %243 = vmatprep.subr.bf16.mxu0 0
    %244 = vmatpush1.bf16.msra.mxu0 %v226
    %245 = vmatprep.subr.bf16.mxu0 0
    %246 = vmatpush1.bf16.msra.mxu0 %v227
    %247 = vmatprep.subr.bf16.mxu0 0
    %248 = vmatpush1.bf16.msra.mxu0 %v228
    %249 = vmatprep.subr.bf16.mxu0 0
    %250 = vmatpush1.bf16.msra.mxu0 %v229
    %251 = vmatprep.subr.bf16.mxu0 0
    %252 = vmatpush1.bf16.msra.mxu0 %v230
    %253 = vmatprep.subr.bf16.mxu0 0
    %254 = vmatpush1.bf16.msra.mxu0 %v231
    %255 = vmatprep.subr.bf16.mxu0 0
    %256 = vmatpush1.bf16.msra.mxu0 %v232
    %257 = vmatprep.subr.bf16.mxu0 0
    %258 = vmatpush1.bf16.msra.mxu0 0
    %259 = vmatprep.subr.bf16.mxu0 0
    %260 = vmatpush1.bf16.msra.mxu0 0
    %261 = vmatprep.subr.bf16.mxu0 0
    %262 = vmatpush1.bf16.msra.mxu0 0
    %263 = vmatprep.subr.bf16.mxu0 0
    %264 = vmatpush1.bf16.msra.mxu0 0
    %265 = vmatprep.subr.bf16.mxu0 0
    %266 = vmatpush1.bf16.msra.mxu0 0
    %267 = vmatprep.subr.bf16.mxu0 0
    %268 = vmatpush1.bf16.msra.mxu0 0
    %269 = vmatprep.subr.bf16.mxu0 0
    %270 = vmatpush1.bf16.msra.mxu0 0
    %271 = vmatprep.subr.bf16.mxu0 0
    %272 = vmatpush1.bf16.msra.mxu0 0
    %273 = vmatprep.mubr.bf16.mxu0 0
    %274 = vmatmul.mubr.bf16.gmra.mrb[0].mxu0 %v176
    %v275 = vpop.f32.mrb[0].mxu0
    %v276 = vadd.f32 0.0, %v275
    %v277 = vpop.f32.mrb[0].mxu0
    %v278 = vpop.f32.mrb[0].mxu0
    %v279 = vpop.f32.mrb[0].mxu0
    %280 = vdwg.mxu0
    %v281 = vrot.slane %v276, 4
    %v282 = vadd.f32 %v276, %v281
    %v283 = vrot.slane %v282, 2
    %v284 = vadd.f32 %v282, %v283
    %v285 = vrot.slane %v284, 1
    %v286 = vadd.f32 %v284, %v285
    %v287 = vmul.f32 %v286, %v145
    %v288 = vmul.f32 %v276, %v276
    %v289 = vrot.slane %v288, 4
    %v290 = vadd.f32 %v288, %v289
    %v291 = vrot.slane %v290, 2
    %v292 = vadd.f32 %v290, %v291
    %v293 = vrot.slane %v292, 1
    %v294 = vadd.f32 %v292, %v293
    %v295 = vmul.f32 %v294, %v145
    %v296 = vmul.f32 %v287, %v287
    %v297 = vsub.f32 %v295, %v296
    %v298 = vmax.f32 %v297, 0.0
    %v299 = vld [vmem:[%s4] sm:$0x1]
    %v300 = vadd.f32 %v298, 1e-05
    %v301 = vrsqrt.pop %v300
    %v302 = vmul.f32 %v299, %v301
    %v303 = vld [vmem:[%s4 + $0x1] sm:$0x1]
    %v304 = vmul.f32 %v287, %v302
    %v305 = vsub.f32 %v303, %v304
    %v306 = vlaneseq
    %v307 = vshrl.u32 %v306, 7
    %v308 = vsub.s32 0, %v307
    %v309 = vrot.slane %v302, %v308
    %v310 = vmul.f32 %v276, %v309
    %v311 = vlaneseq
    %v312 = vshrl.u32 %v311, 7
    %v313 = vsub.s32 0, %v312
    %v314 = vrot.slane %v305, %v313
    %v315 = vadd.f32 %v310, %v314
    %v316 = vmax.f32 %v315, 0.0
    %317 = vst [vmem:[#allocation8] sm:$0xff] %v316
    // Predicated region
    $region34: #{encoder_forward.1} parent=1 // pred_check
      _
    $region35: #{encoder_forward.1} parent=1 // pred_check_branch
      %319 = sbr.rel (0) target = $region37
    $region36: #{encoder_forward.1} parent=1 // pred_region
      %s321 = ssub.s32 128, 128
      %322 = vsyncadd [#allocation4], %s321
      %s324 = sshll.u32 [#allocation8], 4
      %s325 = int_to_ptr.vmem [resolvable:$true] %s324
      %327 = dma.vmem_to_hbm [thread:$0]  %s325, 128, %s5, [#allocation4]
    $region37: #{encoder_forward.1} parent=1 // pred_fallthru
      _
    // Predicated region
    $region38: #{encoder_forward.1} parent=1 // pred_check
      _
    $region39: #{encoder_forward.1} parent=1 // pred_check_branch
      %329 = sbr.rel (0) target = $region41
    $region40: #{encoder_forward.1} parent=1 // pred_region
      %330 = dma.done [#allocation4], 128
    $region41: #{encoder_forward.1} parent=1 // pred_fallthru
      _
    %331 = vsyncpa [#allocation3], 1
    %332 = vsyncpa [#allocation6], 1
    %333 = vsyncpa [#allocation4], 1

</llo_original>
